<compile_context>
chip_gen: v6e
topology: v6e:2x2x1
jax: 0.10.0
libtpu: 0.0.40
codegen_flags: <defaults>
</compile_context>

<pallas_src>
import math
import jax
import jax.numpy as jnp
from jax.experimental import pallas as pl
from jax.experimental.pallas import tpu as pltpu


# ---------------------------------------------------------------------------
# Kernel
# ---------------------------------------------------------------------------
def _pooler_kernel(x_ref, w_ref, b_ref, o_ref):
    # x_ref: (B, H_in)          resident first-token slab (constant block idx)
    # w_ref: (H_in, TN)         contiguous pre-swizzled weight tile (lead dim squeezed)
    # b_ref: (N_TILES, 1, H_out//N_TILES)  resident bias, indexed per tile
    # o_ref: (B, TN)
    j = pl.program_id(0)
    x = x_ref[...].astype(w_ref.dtype)                      # tiny VPU cast, hidden under DMA
    y = jnp.dot(x, w_ref[...], preferred_element_type=jnp.float32)
    b = b_ref[j].astype(jnp.float32)                        # (1, TN), broadcast over rows
    o_ref[...] = jnp.tanh(y + b).astype(o_ref.dtype)        # f32 bias+tanh, cast at store


# ---------------------------------------------------------------------------
# Tile policy (bytes-aware, even-grid preference for v7x megacore)
# ---------------------------------------------------------------------------
def _pick_tile_n(h_out: int, h_in: int, w_itemsize: int,
                 budget_bytes: int = 24 * 1024 * 1024) -> int:
    """Largest lane-dense (multiple-of-128) tile dividing h_out that fits the
    VMEM budget, preferring an even grid length (>=2) so v7x's two TCs split
    the parallel axis evenly. Falls back to the full width for toy sizes."""
    cands = [c for c in range(128, h_out + 1, 128) if h_out % c == 0]
    if not cands:
        return h_out  # full-block escape hatch (toy / non-128-aligned widths)

    def fits(tn):
        n_tiles = h_out // tn
        wbuf = 3 if n_tiles >= 4 else 2                    # weight multi-buffer depth
        need = wbuf * h_in * tn * w_itemsize + (1 << 20)   # + ~1 MiB for x/bias/out
        return need <= budget_bytes

    fitting = [c for c in cands if fits(c)] or [min(cands)]
    even = [c for c in fitting if (h_out // c) >= 2 and (h_out // c) % 2 == 0]
    pool = even if even else fitting
    return max(pool)


# ---------------------------------------------------------------------------
# One-time (offline / checkpoint-prep-time) parameter preparation
# ---------------------------------------------------------------------------
def prepare_pooler_params(weight, bias, *, weight_dtype=jnp.bfloat16,
                          tile_n=None, vmem_budget_bytes=24 * 1024 * 1024):
    """weight: (H_out, H_in) PyTorch layout; bias: (H_out,).

    Returns (w_tiles, b_tiles, tile_n) where
      w_tiles: (H_out//tn, H_in, tn) contiguous per-tile (in, out) slabs, cast
               to `weight_dtype` (bf16 halves the dominant HBM stream),
      b_tiles: (H_out//tn, 1, tn)."""
    H_out, H_in = weight.shape
    w_item = jnp.dtype(weight_dtype).itemsize
    tn = tile_n if tile_n is not None else _pick_tile_n(H_out, H_in, w_item,
                                                        vmem_budget_bytes)
    assert H_out % tn == 0, f"tile_n={tn} must divide H_out={H_out}"
    n_tiles = H_out // tn

    # (out,in) -> (in,out) -> split out axis -> (n_tiles, in, tn), one real
    # data movement at checkpoint-prep time, never per call.
    w_tiles = jnp.transpose(
        jnp.transpose(weight).astype(weight_dtype).reshape(H_in, n_tiles, tn),
        (1, 0, 2))
    b_tiles = bias.reshape(n_tiles, 1, tn)
    return w_tiles, b_tiles, tn


# ---------------------------------------------------------------------------
# Forward wrapper
# ---------------------------------------------------------------------------
def bert_pooler(hidden_states, w_tiles, b_tiles):
    """hidden_states: (B, S, H_in); w_tiles: (n_tiles, H_in, tn);
    b_tiles: (n_tiles, 1, tn). Returns (B, H_out) pooled output."""
    B, S, H_in = hidden_states.shape
    n_tiles, wH_in, tn = w_tiles.shape
    assert wH_in == H_in
    assert b_tiles.shape == (n_tiles, 1, tn)
    H_out = n_tiles * tn

    # First-token slab. Metadata-only reshape -> dense (B, H_in) block at (0,0):
    # one clean DMA (B on sublanes), no 1-of-8-sublane strided reads.
    if S == 1 or H_in % 128 == 0:
        x2 = hidden_states.reshape(B, S * H_in)
    else:
        # Non-128-aligned toy widths: tiny wrapper-side slice keeps the block
        # a full-array (B, H_in) block.  # TODO(synk): lane-align H_in in prod.
        x2 = hidden_states[:, 0, :]
    x_spec = pl.BlockSpec((B, H_in), lambda j: (0, 0))          # resident

    w_kwargs = {}
    if n_tiles >= 4:
        # Enough steps to amortize deeper buffering of the dominant stream.
        w_kwargs["pipeline_mode"] = pl.Buffered(3)
    w_spec = pl.BlockSpec((pl.Squeezed(), H_in, tn), lambda j: (j, 0, 0),
                          **w_kwargs)

    b_spec = pl.BlockSpec((n_tiles, 1, tn), lambda j: (0, 0, 0))  # resident
    o_spec = pl.BlockSpec((B, tn), lambda j: (0, j))

    # Explicit VMEM budget (covers v5e 16 MiB / v7x 32 MiB default scoped limits).
    w_item = w_tiles.dtype.itemsize
    x_item = hidden_states.dtype.itemsize
    wbuf = 3 if n_tiles >= 4 else 2
    need = (wbuf * H_in * tn * w_item            # weight multi-buffer
            + 2 * B * H_in * x_item              # resident x (conservative x2)
            + 2 * B * tn * x_item                # output double-buffer
            + 2 * H_out * b_tiles.dtype.itemsize)
    vmem_limit = int(min(max(2 * need, 16 * 1024 * 1024), 64 * 1024 * 1024))

    cost = pl.CostEstimate(
        flops=2 * B * H_in * H_out,
        transcendentals=B * H_out,
        bytes_accessed=(H_in * H_out * w_item            # weight stream (dominant)
                        + B * H_in * x_item              # first-token reads
                        + H_out * b_tiles.dtype.itemsize
                        + B * H_out * x_item),           # output writes
    )

    return pl.pallas_call(
        _pooler_kernel,
        out_shape=jax.ShapeDtypeStruct((B, H_out), hidden_states.dtype),
        grid=(n_tiles,),
        in_specs=[x_spec, w_spec, b_spec],
        out_specs=o_spec,
        compiler_params=pltpu.CompilerParams(
            dimension_semantics=("parallel",),   # v7x: N tiles split across both TCs
            vmem_limit_bytes=vmem_limit,
        ),
        cost_estimate=cost,
    )(x2, w_tiles, b_tiles)


# ---------------------------------------------------------------------------
# Deterministic init mimicking nn.Linear / kaiming_uniform_(a=sqrt(5))
# ---------------------------------------------------------------------------
def init_params(key, hidden_size, dtype=jnp.float32):
    """Returns weight in PyTorch layout (out, in) and bias (out,)."""
    kw, kb = jax.random.split(key)
    fan_in = hidden_size
    bound = 1.0 / math.sqrt(fan_in)  # kaiming_uniform(a=sqrt(5)) -> 1/sqrt(fan_in)
    weight = jax.random.uniform(kw, (hidden_size, hidden_size), dtype,
                                minval=-bound, maxval=bound)
    bias = jax.random.uniform(kb, (hidden_size,), dtype,
                              minval=-bound, maxval=bound)
    return weight, bias


if __name__ == "__main__":
    B, S, H = 4, 8, 256
    key = jax.random.PRNGKey(0)
    k_x, k_p = jax.random.split(key)

    hidden_states = jax.random.normal(k_x, (B, S, H), dtype=jnp.float32)
    weight, bias = init_params(k_p, H)

    # One-time parameter prep: bf16 weight, transposed + pre-swizzled into
    # contiguous (n_tiles, H_in, tn) slabs; bias reshaped per tile.
    w_tiles, b_tiles, tn = prepare_pooler_params(weight, bias,
                                                 weight_dtype=jnp.bfloat16)

    out = bert_pooler(hidden_states, w_tiles, b_tiles)
    out = jax.block_until_ready(out)
    assert out.shape == (B, H)

    # References: bf16-emulated (tight) and full-f32 module semantics (loose,
    # bounded by the bf16 weight quantization adopted per the perf review).
    x0 = hidden_states[:, 0, :]
    ref_bf16 = jnp.tanh(
        jnp.dot(x0.astype(jnp.bfloat16), weight.T.astype(jnp.bfloat16),
                preferred_element_type=jnp.float32) + bias)
    ref_f32 = jnp.tanh(x0 @ weight.T + bias)

    assert jnp.allclose(out, ref_bf16, atol=5e-3, rtol=5e-3), "bf16 ref mismatch"
    assert jnp.allclose(out, ref_f32, atol=5e-2, rtol=5e-2), "f32 ref mismatch"

    print("KERNEL_OK")
</pallas_src>

<mosaic_0001>
module attributes {stable_mosaic.version = 11 : i64} {
  func.func @_pooler_kernel(%arg0: i32, %arg1: memref<4x256xf32, #tpu.memory_space<vmem>>, %arg2: memref<1x256x128xbf16, #tpu.memory_space<vmem>>, %arg3: memref<2x1x128xf32, #tpu.memory_space<vmem>>, %arg4: memref<4x128xf32, #tpu.memory_space<vmem>>) attributes {dimension_semantics = [#tpu.dimension_semantics<parallel>], iteration_bounds = array<i64: 2>, scalar_prefetch = 0 : i64, scratch_operands = 0 : i64, tpu.core_type = #tpu.core_type<tc>, window_params = [{transform_indices = @transform_0, window_bounds = array<i64: 4, 256>}, {transform_indices = @transform_1, window_bounds = array<i64: 1, 256, 128>}, {pipeline_mode = #tpu.pipeline_mode<synchronous>, transform_indices = @transform_2, window_bounds = array<i64: 2, 1, 128>}, {transform_indices = @transform_3, window_bounds = array<i64: 4, 128>}]} {
    %c0 = arith.constant 0 : index
    %c0_0 = arith.constant 0 : index
    %0 = vector.load %arg1[%c0, %c0_0] : memref<4x256xf32, #tpu.memory_space<vmem>>, vector<4x256xf32>
    %1 = arith.truncf %0 : vector<4x256xf32> to vector<4x256xbf16>
    %c0_1 = arith.constant 0 : index
    %c0_2 = arith.constant 0 : index
    %c0_3 = arith.constant 0 : index
    %2 = vector.load %arg2[%c0_1, %c0_2, %c0_3] : memref<1x256x128xbf16, #tpu.memory_space<vmem>>, vector<1x256x128xbf16>
    %3 = vector.shape_cast %2 : vector<1x256x128xbf16> to vector<256x128xbf16>
    %cst = arith.constant dense<0.000000e+00> : vector<4x128xf32>
    %4 = tpu.matmul %1, %3, %cst {dimension_numbers = #tpu.dot_dimension_numbers<[1], [0], [0], [1], [0, 0, 1, 1], [], []>} : vector<4x256xbf16>, vector<256x128xbf16>, vector<4x128xf32> -> vector<4x128xf32>
    %5 = arith.index_cast %arg0 : i32 to index
    %c0_4 = arith.constant 0 : index
    %c0_5 = arith.constant 0 : index
    %6 = vector.load %arg3[%5, %c0_4, %c0_5] : memref<2x1x128xf32, #tpu.memory_space<vmem>>, vector<1x1x128xf32>
    %7 = vector.shape_cast %6 : vector<1x1x128xf32> to vector<1x128xf32>
    %8 = vector.broadcast %7 : vector<1x128xf32> to vector<4x128xf32>
    %9 = arith.addf %4, %8 : vector<4x128xf32>
    %10 = math.tanh %9 : vector<4x128xf32>
    %c0_6 = arith.constant 0 : index
    %c0_7 = arith.constant 0 : index
    %11 = vector.load %arg4[%c0_6, %c0_7] : memref<4x128xf32, #tpu.memory_space<vmem>>, vector<4x128xf32>
    tpu.vector_store %arg4[%c0_6, %c0_7], %10 {strides = array<i32>} : memref<4x128xf32, #tpu.memory_space<vmem>>, vector<4x128xf32>,
    return
  }
  func.func @transform_0(%arg0: i32) -> (i32, i32) {
    %c0_i32 = arith.constant 0 : i32
    %c0_i32_0 = arith.constant 0 : i32
    %c0_i32_1 = arith.constant 0 : i32
    return %c0_i32, %c0_i32_0 : i32, i32
  }
  func.func @transform_1(%arg0: i32) -> (i32, i32, i32) {
    %c0_i32 = arith.constant 0 : i32
    %c0_i32_0 = arith.constant 0 : i32
    %c0_i32_1 = arith.constant 0 : i32
    return %arg0, %c0_i32, %c0_i32_0 : i32, i32, i32
  }
  func.func @transform_2(%arg0: i32) -> (i32, i32, i32) {
    %c0_i32 = arith.constant 0 : i32
    %c0_i32_0 = arith.constant 0 : i32
    %c0_i32_1 = arith.constant 0 : i32
    %c0_i32_2 = arith.constant 0 : i32
    return %c0_i32, %c0_i32_0, %c0_i32_1 : i32, i32, i32
  }
  func.func @transform_3(%arg0: i32) -> (i32, i32) {
    %c0_i32 = arith.constant 0 : i32
    %c0_i32_0 = arith.constant 0 : i32
    return %c0_i32, %arg0 : i32, i32
  }
}

</mosaic_0001>

<llo_original>
// kernel: tpu_custom_call.1
$region0: #{tpu_custom_call.1}
  #allocation0 [shape = 'u32[]', space=smem, size = 0x4, offset = 0x4, fixed_abs, tag = 'smem constant byte address 0x4 - core index']
  #allocation1 [shape = 'u32[144,128]{1,0:T(1,128)}', space=vmem, size = 0x12000, scoped, tag = 'internal scratch']
  %s0 = inlined_call_operand.hbm [shape: f32[4,2048], index: 0, kind: input, shape index: {}]
  %s1 = inlined_call_operand.hbm [shape: bf16[2,256,128], index: 1, kind: input, shape index: {}]
  %s2 = inlined_call_operand.vmem [shape: f32[2,1,128], index: 2, kind: input, shape index: {}]
  %s3 = inlined_call_operand.hbm [shape: f32[4,256], index: 3, kind: output, shape index: {}]
  %s4 = sld [smem:[#allocation0]]
  $region53: #{tpu_custom_call.1} parent=0
    _
  %s6 = ssub.s32 1, %s4
  %s7 = scalar_select 0, %s6, %s4
  $region1: #{tpu_custom_call.1} parent=0
    #allocation2 [shape = 'u8[4096]{0}', space=vmem, size = 0x1000, scoped, tag = 'input window, operand 0, single buffered']
    #allocation3 [shape = 's32[2]{0}', space=sflag, size = 0x8, scoped, tag = 'scoped memory for tpu_custom_call.1']
    #allocation4 [shape = 's32[2]{0}', space=sflag, size = 0x8, scoped, tag = 'scoped memory for tpu_custom_call.1']
    #allocation5 [shape = 'u8[131072]{0}', space=vmem, size = 0x20000, scoped, tag = 'input window, operand 1']
    #allocation6 [shape = 's32[2]{0}', space=sflag, size = 0x8, scoped, tag = 'scoped memory for tpu_custom_call.1']
    #allocation7 [shape = 'u8[4096]{0}', space=vmem, size = 0x1000, scoped, tag = 'output window, operand 0']
    %8 = vsyncpa [#allocation3], 0
    %9 = vsyncpa [#allocation6], 0
    %s10 = scalar_lea.sflag [#allocation6], 1
    %11 = vsyncpa %s10, 0
    %12 = vsyncpa [#allocation4], 0
    %s13 = scalar_lea.sflag [#allocation4], 1
    %14 = vsyncpa %s13, 0
    loop: start=0, step=1, limit=4
    $region2: #{tpu_custom_call.1} parent=1 // loop_pre_header
      _
    $region3: #{tpu_custom_call.1} parent=1 // loop_header
      %s16 = sphi 0, %s20
      %p17 = scmp.ge.s32.totalorder %s16, 4
      %s24 = sphi 0, %s24
      %s26 = sphi 0, %s24
      %s27 = sphi 0, %s26
      %s41 = sphi 0, %s27
      %s47 = sphi 0, %s49
      %s50 = sphi 0, %s47
      %s51 = sphi 0, %s50
      %s67 = sphi 0, %s51
      %s71 = sphi 0, %s71
      %s73 = sphi 0, %s71
      %s74 = sphi 0, %s73
      %s88 = sphi 0, %s74
      %s94 = sphi 0, %s96
      %s97 = sphi 0, %s94
      %s98 = sphi 0, %s97
      %s114 = sphi 0, %s98
    $region4: #{tpu_custom_call.1} parent=1 // loop_header_branch
      %19 = sbr.rel (%p17) target = $region8
    $region5: #{tpu_custom_call.1} parent=1 // loop_body
      %s21 = ssub.s32 %s16, 1
      %s22 = ssub.s32 %s16, 2
      %s23 = sadd.s32 %s16, 1
      %s25 = sadd.s32 %s24, 1
      %p28 = scmp.eq.s32.totalorder %s16, 1
      %p29 = scmp.ne.s32.totalorder %s24, %s26
      %p30 = scmp.eq.s32.totalorder %s16, 0
      %p31 = por %p29, %p30
      %p32 = scmp.ne.s32.totalorder %s24, %s26
      %p33 = scmp.eq.s32.totalorder %s21, 1
      %p34 = por %p32, %p33
      %p35 = scmp.ne.s32.totalorder %s26, %s27
      %p36 = scmp.eq.s32.totalorder %s21, 0
      %p37 = por %p35, %p36
      %p38 = scmp.ne.s32.totalorder %s26, %s27
      %p39 = scmp.eq.s32.totalorder %s22, 1
      %p40 = por %p38, %p39
      %p42 = scmp.ne.s32.totalorder %s27, %s41
      %p43 = scmp.eq.s32.totalorder %s22, 0
      %p44 = por %p42, %p43
      %s45 = ssub.s32 %s16, %s23
      %p46 = scmp.eq.s32.totalorder %s45, 0
      %s48 = sadd.s32 %s47, 1
      %s49 = scalar_select %p46, %s47, %s48
      %p52 = pneg %p46
      %p53 = scmp.eq.s32.totalorder %s16, 1
      %p54 = por %p52, %p53
      %p55 = scmp.ne.s32.totalorder %s47, %s50
      %p56 = scmp.eq.s32.totalorder %s16, 0
      %p57 = por %p55, %p56
      %p58 = scmp.ne.s32.totalorder %s47, %s50
      %p59 = scmp.eq.s32.totalorder %s21, 1
      %p60 = por %p58, %p59
      %p61 = scmp.ne.s32.totalorder %s50, %s51
      %p62 = scmp.eq.s32.totalorder %s21, 0
      %p63 = por %p61, %p62
      %p64 = scmp.ne.s32.totalorder %s50, %s51
      %p65 = scmp.eq.s32.totalorder %s22, 1
      %p66 = por %p64, %p65
      %p68 = scmp.ne.s32.totalorder %s51, %s67
      %p69 = scmp.eq.s32.totalorder %s22, 0
      %p70 = por %p68, %p69
      %s72 = sadd.s32 %s71, 1
      %p75 = scmp.eq.s32.totalorder %s16, 1
      %p76 = scmp.ne.s32.totalorder %s71, %s73
      %p77 = scmp.eq.s32.totalorder %s16, 0
      %p78 = por %p76, %p77
      %p79 = scmp.ne.s32.totalorder %s71, %s73
      %p80 = scmp.eq.s32.totalorder %s21, 1
      %p81 = por %p79, %p80
      %p82 = scmp.ne.s32.totalorder %s73, %s74
      %p83 = scmp.eq.s32.totalorder %s21, 0
      %p84 = por %p82, %p83
      %p85 = scmp.ne.s32.totalorder %s73, %s74
      %p86 = scmp.eq.s32.totalorder %s22, 1
      %p87 = por %p85, %p86
      %p89 = scmp.ne.s32.totalorder %s74, %s88
      %p90 = scmp.eq.s32.totalorder %s22, 0
      %p91 = por %p89, %p90
      %s92 = ssub.s32 %s16, %s23
      %p93 = scmp.eq.s32.totalorder %s92, 0
      %s95 = sadd.s32 %s94, 1
      %s96 = scalar_select %p93, %s94, %s95
      %p99 = pneg %p93
      %p100 = scmp.eq.s32.totalorder %s16, 1
      %p101 = por %p99, %p100
      %p102 = scmp.ne.s32.totalorder %s94, %s97
      %p103 = scmp.eq.s32.totalorder %s16, 0
      %p104 = por %p102, %p103
      %p105 = scmp.ne.s32.totalorder %s94, %s97
      %p106 = scmp.eq.s32.totalorder %s21, 1
      %p107 = por %p105, %p106
      %p108 = scmp.ne.s32.totalorder %s97, %s98
      %p109 = scmp.eq.s32.totalorder %s21, 0
      %p110 = por %p108, %p109
      %p111 = scmp.ne.s32.totalorder %s97, %s98
      %p112 = scmp.eq.s32.totalorder %s22, 1
      %p113 = por %p111, %p112
      %p115 = scmp.ne.s32.totalorder %s98, %s114
      %p116 = scmp.eq.s32.totalorder %s22, 0
      %p117 = por %p115, %p116
      %p118 = scmp.le.s32.totalorder 1, %s16
      %p119 = scmp.lt.s32.totalorder %s16, 3
      %p120 = pnand %p118, %p119
      %p121 = pneg %p120
      // Predicated region
      $region9: #{tpu_custom_call.1} parent=5 // pred_check
        _
      $region10: #{tpu_custom_call.1} parent=5 // pred_check_branch
        %123 = sbr.rel (%p120) target = $region12
      $region11: #{tpu_custom_call.1} parent=5 // pred_region
        %s124 = ssub.s32 %s16, 1
        // Predicated region
        $region13: #{tpu_custom_call.1} parent=11 // pred_check
          %p125 = pneg %p37
        $region14: #{tpu_custom_call.1} parent=11 // pred_check_branch
          %127 = sbr.rel (%p125) target = $region16
        $region15: #{tpu_custom_call.1} parent=11 // pred_region
          %s129 = ssub.s32 128, 128
          %130 = vsyncadd [#allocation3], %s129
          %s132 = sshll.u32 [#allocation2], 4
          %s133 = int_to_ptr.vmem [resolvable:$true] %s132
          %135 = dma.hbm_to_vmem [thread:$0]  %s0, 128, %s133, [#allocation3]
        $region16: #{tpu_custom_call.1} parent=11 // pred_fallthru
          _
        // Predicated region
        $region17: #{tpu_custom_call.1} parent=11 // pred_check
          %p136 = pneg %p84
        $region18: #{tpu_custom_call.1} parent=11 // pred_check_branch
          %138 = sbr.rel (%p136) target = $region20
        $region19: #{tpu_custom_call.1} parent=11 // pred_region
          _
        $region20: #{tpu_custom_call.1} parent=11 // pred_fallthru
          _
      $region12: #{tpu_custom_call.1} parent=5 // pred_fallthru
        _
      %p139 = scmp.lt.s32.totalorder %s16, 2
      // Predicated region
      $region21: #{tpu_custom_call.1} parent=5 // pred_check
        %p140 = pneg %p139
      $region22: #{tpu_custom_call.1} parent=5 // pred_check_branch
        %142 = sbr.rel (%p140) target = $region24
      $region23: #{tpu_custom_call.1} parent=5 // pred_region
        // Predicated region
        $region25: #{tpu_custom_call.1} parent=23 // pred_check
          %p143 = pneg %p57
        $region26: #{tpu_custom_call.1} parent=23 // pred_check_branch
          %145 = sbr.rel (%p143) target = $region28
        $region27: #{tpu_custom_call.1} parent=23 // pred_region
          %s146 = sand.u32 %s47, 1
          %s147 = scalar_lea.sflag [#allocation6], %s146
          %s148 = sand.u32 %s47, 1
          %s149 = smul.addr %s148, 128
          %s150 = scalar_lea.vmem [#allocation5], %s149
          %s152 = ssub.s32 2048, 2048
          %153 = vsyncadd %s147, %s152
          %s154 = smul.addr %s16, 32
          %s155 = smul.addr %s154, 64
          %s156 = scalar_lea.hbm %s1, %s155
          %s157 = sshll.u32 %s150, 4
          %s158 = int_to_ptr.vmem [resolvable:$true] %s157
          %163 = dma.hbm_to_vmem [thread:$0]  %s156, 2048, %s158, %s147, 64, 64, 4
        $region28: #{tpu_custom_call.1} parent=23 // pred_fallthru
          _
      $region24: #{tpu_custom_call.1} parent=5 // pred_fallthru
        _
      %p164 = scmp.le.s32.totalorder 1, %s16
      %p165 = scmp.lt.s32.totalorder %s16, 3
      %p166 = pnand %p164, %p165
      %p167 = pneg %p166
      // Predicated region
      $region29: #{tpu_custom_call.1} parent=5 // pred_check
        _
      $region30: #{tpu_custom_call.1} parent=5 // pred_check_branch
        %169 = sbr.rel (%p166) target = $region32
      $region31: #{tpu_custom_call.1} parent=5 // pred_region
        %s170 = ssub.s32 %s16, 1
        // Predicated region
        $region33: #{tpu_custom_call.1} parent=31 // pred_check
          %p171 = pneg %p37
        $region34: #{tpu_custom_call.1} parent=31 // pred_check_branch
          %173 = sbr.rel (%p171) target = $region36
        $region35: #{tpu_custom_call.1} parent=31 // pred_region
          %174 = dma.done [#allocation3], 128
        $region36: #{tpu_custom_call.1} parent=31 // pred_fallthru
          _
        %s175 = sand.u32 %s50, 1
        %s176 = scalar_lea.sflag [#allocation6], %s175
        %s177 = sand.u32 %s50, 1
        %s178 = smul.addr %s177, 128
        %s179 = scalar_lea.vmem [#allocation5], %s178
        // Predicated region
        $region37: #{tpu_custom_call.1} parent=31 // pred_check
          %p180 = pneg %p63
        $region38: #{tpu_custom_call.1} parent=31 // pred_check_branch
          %182 = sbr.rel (%p180) target = $region40
        $region39: #{tpu_custom_call.1} parent=31 // pred_region
          %183 = dma.done %s176, 2048
        $region40: #{tpu_custom_call.1} parent=31 // pred_fallthru
          _
        %p184 = pneg %p37
        %p185 = pneg %p34
        %s186 = sand.u32 %s50, 1
        %s187 = scalar_lea.sflag [#allocation6], %s186
        %s188 = sand.u32 %s50, 1
        %s189 = smul.addr %s188, 128
        %s190 = scalar_lea.vmem [#allocation5], %s189
        %p191 = pneg %p63
        %p192 = pneg %p60
        %p193 = pneg %p84
        %p194 = pneg %p81
        %p195 = pneg %p110
        %p196 = pneg %p107
        %s197 = sand.u32 %s97, 1
        %s198 = scalar_lea.sflag [#allocation4], %s197
        %s199 = sand.u32 %s97, 1
        %s200 = smul.addr %s199, 4
        %s201 = scalar_lea.vmem [#allocation7], %s200
        %v203 = vld [vmem:[#allocation2] sm:$0xff]
        %v205 = vcombine.high %v203, %v203
        %v207 = vpack.c.bf16 %v203, %v203
        %v208 = vpack.c.bf16 %v205, %v205
        %v209 = vld [vmem:[%s179] sm:$0xf]
        %v210 = vld [vmem:[%s179 + $0x4] sm:$0xf]
        %v211 = vld [vmem:[%s179 + $0x8] sm:$0xf]
        %v212 = vld [vmem:[%s179 + $0xc] sm:$0xf]
        %v213 = vld [vmem:[%s179 + $0x10] sm:$0xf]
        %v214 = vld [vmem:[%s179 + $0x14] sm:$0xf]
        %v215 = vld [vmem:[%s179 + $0x18] sm:$0xf]
        %v216 = vld [vmem:[%s179 + $0x1c] sm:$0xf]
        %v217 = vld [vmem:[%s179 + $0x20] sm:$0xf]
        %v218 = vld [vmem:[%s179 + $0x24] sm:$0xf]
        %v219 = vld [vmem:[%s179 + $0x28] sm:$0xf]
        %v220 = vld [vmem:[%s179 + $0x2c] sm:$0xf]
        %v221 = vld [vmem:[%s179 + $0x30] sm:$0xf]
        %v222 = vld [vmem:[%s179 + $0x34] sm:$0xf]
        %v223 = vld [vmem:[%s179 + $0x38] sm:$0xf]
        %v224 = vld [vmem:[%s179 + $0x3c] sm:$0xf]
        %v225 = vld [vmem:[%s179 + $0x40] sm:$0xf]
        %v226 = vld [vmem:[%s179 + $0x44] sm:$0xf]
        %v227 = vld [vmem:[%s179 + $0x48] sm:$0xf]
        %v228 = vld [vmem:[%s179 + $0x4c] sm:$0xf]
        %v229 = vld [vmem:[%s179 + $0x50] sm:$0xf]
        %v230 = vld [vmem:[%s179 + $0x54] sm:$0xf]
        %v231 = vld [vmem:[%s179 + $0x58] sm:$0xf]
        %v232 = vld [vmem:[%s179 + $0x5c] sm:$0xf]
        %v233 = vld [vmem:[%s179 + $0x60] sm:$0xf]
        %v234 = vld [vmem:[%s179 + $0x64] sm:$0xf]
        %v235 = vld [vmem:[%s179 + $0x68] sm:$0xf]
        %v236 = vld [vmem:[%s179 + $0x6c] sm:$0xf]
        %v237 = vld [vmem:[%s179 + $0x70] sm:$0xf]
        %v238 = vld [vmem:[%s179 + $0x74] sm:$0xf]
        %v239 = vld [vmem:[%s179 + $0x78] sm:$0xf]
        %v240 = vld [vmem:[%s179 + $0x7c] sm:$0xf]
        %s241 = scalar_lea.vmem %s2, %s21
        %v242 = vld [vmem:[%s241] sm:$0x1]
        %v244 = vlaneseq
        %v245 = vshrl.u32 %v244, 7
        %v246 = vsub.s32 0, %v245
        %v247 = vrot.slane %v242, %v246
        %v281 = vunpack.c.l.b16 %v209
        %v282 = vunpack.c.l.b16 %v210
        %v283 = vunpack.c.l.b16 %v211
        %v284 = vunpack.c.l.b16 %v212
        %v285 = vunpack.c.l.b16 %v213
        %v286 = vunpack.c.l.b16 %v214
        %v287 = vunpack.c.l.b16 %v215
        %v288 = vunpack.c.l.b16 %v216
        %v289 = vunpack.c.l.b16 %v217
        %v290 = vunpack.c.l.b16 %v218
        %v291 = vunpack.c.l.b16 %v219
        %v292 = vunpack.c.l.b16 %v220
        %v293 = vunpack.c.l.b16 %v221
        %v294 = vunpack.c.l.b16 %v222
        %v295 = vunpack.c.l.b16 %v223
        %v296 = vunpack.c.l.b16 %v224
        %v297 = vunpack.c.l.b16 %v225
        %v298 = vunpack.c.l.b16 %v226
        %v299 = vunpack.c.l.b16 %v227
        %v300 = vunpack.c.l.b16 %v228
        %v301 = vunpack.c.l.b16 %v229
        %v302 = vunpack.c.l.b16 %v230
        %v303 = vunpack.c.l.b16 %v231
        %v304 = vunpack.c.l.b16 %v232
        %v305 = vunpack.c.l.b16 %v233
        %v306 = vunpack.c.l.b16 %v234
        %v307 = vunpack.c.l.b16 %v235
        %v308 = vunpack.c.l.b16 %v236
        %v309 = vunpack.c.l.b16 %v237
        %v310 = vunpack.c.l.b16 %v238
        %v311 = vunpack.c.l.b16 %v239
        %v312 = vunpack.c.l.b16 %v240
        %v313 = vpack.c.b16 %v282, %v281
        %v314 = vpack.c.b16 %v284, %v283
        %v315 = vpack.c.b16 %v286, %v285
        %v316 = vpack.c.b16 %v288, %v287
        %v317 = vpack.c.b16 %v290, %v289
        %v318 = vpack.c.b16 %v292, %v291
        %v319 = vpack.c.b16 %v294, %v293
        %v320 = vpack.c.b16 %v296, %v295
        %v321 = vpack.c.b16 %v298, %v297
        %v322 = vpack.c.b16 %v300, %v299
        %v323 = vpack.c.b16 %v302, %v301
        %v324 = vpack.c.b16 %v304, %v303
        %v325 = vpack.c.b16 %v306, %v305
        %v326 = vpack.c.b16 %v308, %v307
        %v327 = vpack.c.b16 %v310, %v309
        %v328 = vpack.c.b16 %v312, %v311
        %345 = vmatprep.subr.bf16.mxu0 0
        %346 = vmatpush1.bf16.msra.mxu0 %v320
        %347 = vmatprep.subr.bf16.mxu0 0
        %348 = vmatpush1.bf16.msra.mxu0 %v319
        %349 = vmatprep.subr.bf16.mxu0 0
        %350 = vmatpush1.bf16.msra.mxu0 %v318
        %351 = vmatprep.subr.bf16.mxu0 0
        %352 = vmatpush1.bf16.msra.mxu0 %v317
        %353 = vmatprep.subr.bf16.mxu0 0
        %354 = vmatpush1.bf16.msra.mxu0 %v316
        %355 = vmatprep.subr.bf16.mxu0 0
        %356 = vmatpush1.bf16.msra.mxu0 %v315
        %357 = vmatprep.subr.bf16.mxu0 0
        %358 = vmatpush1.bf16.msra.mxu0 %v314
        %359 = vmatprep.subr.bf16.mxu0 0
        %360 = vmatpush1.bf16.msra.mxu0 %v313
        %361 = vmatprep.subr.bf16.mxu0 0
        %362 = vmatpush2.bf16.msra.mxu0 %v328
        %363 = vmatprep.subr.bf16.mxu0 0
        %364 = vmatpush2.bf16.msra.mxu0 %v327
        %365 = vmatprep.subr.bf16.mxu0 0
        %366 = vmatpush2.bf16.msra.mxu0 %v326
        %367 = vmatprep.subr.bf16.mxu0 0
        %368 = vmatpush2.bf16.msra.mxu0 %v325
        %369 = vmatprep.subr.bf16.mxu0 0
        %370 = vmatpush2.bf16.msra.mxu0 %v324
        %371 = vmatprep.subr.bf16.mxu0 0
        %372 = vmatpush2.bf16.msra.mxu0 %v323
        %373 = vmatprep.subr.bf16.mxu0 0
        %374 = vmatpush2.bf16.msra.mxu0 %v322
        %375 = vmatprep.subr.bf16.mxu0 0
        %376 = vmatpush2.bf16.msra.mxu0 %v321
        %377 = vmatprep.mubr.bf16.mxu0 %v208
        %378 = vmatmul.mubr.bf16.gmra.mxu0 %v207
        %v379 = vpop.f32.mrf.mxu0
        %v380 = vadd.f32 %v247, %v379
        %v381 = vpop.f32.mrf.mxu0
        %v382 = vpop.f32.mrf.mxu0
        %v383 = vpop.f32.mrf.mxu0
        %384 = vdwg.mxu0
        %v385 = vtanh.pop %v380
        %386 = vst [vmem:[%s201] sm:$0xf] %v385
        %s387 = sand.u32 %s97, 1
        %s388 = scalar_lea.sflag [#allocation4], %s387
        %s389 = sand.u32 %s97, 1
        %s390 = smul.addr %s389, 4
        %s391 = scalar_lea.vmem [#allocation7], %s390
        // Predicated region
        $region41: #{tpu_custom_call.1} parent=31 // pred_check
          %p392 = pneg %p107
        $region42: #{tpu_custom_call.1} parent=31 // pred_check_branch
          %394 = sbr.rel (%p392) target = $region44
        $region43: #{tpu_custom_call.1} parent=31 // pred_region
          %s396 = ssub.s32 64, 64
          %397 = vsyncadd %s388, %s396
          %s398 = smul.addr %s21, 64
          %s399 = scalar_lea.hbm %s3, %s398
          %s401 = sshll.u32 %s391, 4
          %s402 = int_to_ptr.vmem [resolvable:$true] %s401
          %404 = dma.vmem_to_hbm [thread:$0]  %s402, 64, %s399, %s388
        $region44: #{tpu_custom_call.1} parent=31 // pred_fallthru
          _
      $region32: #{tpu_custom_call.1} parent=5 // pred_fallthru
        _
      %p405 = scmp.le.s32.totalorder 2, %s16
      // Predicated region
      $region45: #{tpu_custom_call.1} parent=5 // pred_check
        %p406 = pneg %p405
      $region46: #{tpu_custom_call.1} parent=5 // pred_check_branch
        %408 = sbr.rel (%p406) target = $region48
      $region47: #{tpu_custom_call.1} parent=5 // pred_region
        %s409 = ssub.s32 %s16, 2
        // Predicated region
        $region49: #{tpu_custom_call.1} parent=47 // pred_check
          %p410 = pneg %p113
        $region50: #{tpu_custom_call.1} parent=47 // pred_check_branch
          %412 = sbr.rel (%p410) target = $region52
        $region51: #{tpu_custom_call.1} parent=47 // pred_region
          %s413 = sand.u32 %s98, 1
          %s414 = scalar_lea.sflag [#allocation4], %s413
          %s415 = sand.u32 %s98, 1
          %s416 = smul.addr %s415, 4
          %s417 = scalar_lea.vmem [#allocation7], %s416
          %418 = dma.done %s414, 64
        $region52: #{tpu_custom_call.1} parent=47 // pred_fallthru
          _
      $region48: #{tpu_custom_call.1} parent=5 // pred_fallthru
        _
    $region6: #{tpu_custom_call.1} parent=1 // loop_footer
      %s20 = sadd.s32 1, %s16
    $region7: #{tpu_custom_call.1} parent=1 // loop_footer_branch
      %15 = sbr.rel target = $region3
    $region8: #{tpu_custom_call.1} parent=1 // loop_exit
      _
    %419 = vsyncpa [#allocation3], 1
    %s420 = scalar_lea.sflag [#allocation3], 1
    %421 = vsyncpa %s420, 1
    %422 = vsyncpa [#allocation6], 1
    %s423 = scalar_lea.sflag [#allocation6], 1
    %424 = vsyncpa %s423, 1
    %425 = vsyncpa [#allocation4], 1
    %s426 = scalar_lea.sflag [#allocation4], 1
    %427 = vsyncpa %s426, 1

</llo_original>
